<compile_context>
chip_gen: v7x
topology: tpu7x:2x2x1
jax: 0.10.0
libtpu: 0.0.40
codegen_flags: <defaults>
</compile_context>

<pallas_src>
import functools

import jax
import jax.numpy as jnp
from jax.experimental import pallas as pl
from jax.experimental.pallas import tpu as pltpu


def _focal_loss_kernel(x_ref, t_ref, a_ref, out_ref, *, gamma, hw, tl):
    s = pl.program_id(1)

    x = x_ref[0].astype(jnp.float32)          # (C, tl)  logits, classes on sublanes
    t = t_ref[0]                              # (1, tl)  int32 targets
    a = a_ref[...]                            # (C, 1)   f32 per-class alpha

    C = x.shape[0]

    # log-softmax over the class (sublane) axis.
    m = jnp.max(x, axis=0, keepdims=True)                        # (1, tl)
    z = x - m
    lse = jnp.log(jnp.sum(jnp.exp(z), axis=0, keepdims=True))    # (1, tl)

    # One-hot gather of the target class along the class axis.
    cls = jax.lax.broadcasted_iota(jnp.int32, (C, tl), 0)
    onehot = cls == t                                             # (C, tl)
    z_t = jnp.sum(jnp.where(onehot, z, 0.0), axis=0, keepdims=True)   # (1, tl)
    at = jnp.sum(jnp.where(onehot, a, 0.0), axis=0, keepdims=True)    # (1, tl)

    logpt = z_t - lse                                             # (1, tl)
    pt = jnp.exp(logpt)
    omp = jnp.maximum(1.0 - pt, 0.0)   # clamp: avoids NaN in pow from fp rounding
    if gamma == 0.0:
        focal = jnp.ones_like(omp)
    elif gamma == 1.0:
        focal = omp
    elif gamma == 2.0:
        focal = omp * omp
    else:
        focal = omp ** gamma
    loss = -focal * logpt * at                                    # (1, tl)

    # Mask the ragged tail of the spatial axis (last block may overrun H*W).
    col = s * tl + jax.lax.broadcasted_iota(jnp.int32, (1, tl), 1)
    loss = jnp.where(col < hw, loss, 0.0)

    # Per-block partial sum, broadcast into the lane-dense output slab.
    part = jnp.sum(loss)
    out_ref[...] = jnp.zeros(out_ref.shape, jnp.float32) + part


def _choose_lane_tile(hw, c, itemsize):
    """Lane tile: multiple of 128, a few MiB of double-buffered VMEM."""
    cp = max(8, c)                                   # classes pad to >= 8 sublanes
    budget = 4 * 1024 * 1024                         # ~4 MiB of pipelined buffers
    per_lane = 2 * (cp * itemsize + 8 * 4)           # 2 buffers x (logits + padded i32 target)
    tl = budget // per_lane
    tl = max(128, min(tl, 32768))
    tl = (tl // 128) * 128
    hw_ceil = ((hw + 127) // 128) * 128
    return max(128, min(tl, hw_ceil))


def focal_loss(logits, target, gamma=2.0, alpha=None, size_average=True,
               lane_tile=None):
    """Pallas TPU focal loss matching PyTorch FocalLoss.forward semantics."""
    if logits.ndim == 2:
        # Already (M, C): put classes on sublanes (single transpose pass).
        x = jnp.transpose(logits, (1, 0))[None, :, :]            # (1, C, M)
        t = target.reshape(1, 1, -1).astype(jnp.int32)
    else:
        # (N, C, *spatial): free reshape, no transpose / pad HBM passes.
        n0, c0 = logits.shape[0], logits.shape[1]
        x = logits.reshape(n0, c0, -1)                           # (N, C, HW)
        t = target.reshape(n0, 1, -1).astype(jnp.int32)          # (N, 1, HW)

    N, C, HW = x.shape
    M = N * HW

    if alpha is None:
        a = jnp.ones((C, 1), jnp.float32)
    elif isinstance(alpha, (float, int)):
        # PyTorch builds [alpha, 1-alpha]; only sensible for C == 2.
        assert C == 2, "scalar alpha only valid for binary (C==2) inputs"
        a = jnp.array([[float(alpha)], [1.0 - float(alpha)]], jnp.float32)
    else:
        a = jnp.asarray(alpha, jnp.float32).reshape(C, 1)

    tl = lane_tile or _choose_lane_tile(HW, C, jnp.dtype(x.dtype).itemsize)
    sb = pl.cdiv(HW, tl)

    kernel = functools.partial(_focal_loss_kernel, gamma=float(gamma), hw=HW, tl=tl)

    partials = pl.pallas_call(
        kernel,
        out_shape=jax.ShapeDtypeStruct((N, sb, 8, 128), jnp.float32),
        grid_spec=pltpu.PrefetchScalarGridSpec(
            num_scalar_prefetch=0,
            grid=(N, sb),
            in_specs=[
                pl.BlockSpec((1, C, tl), lambda n, s: (n, 0, s)),   # logits tile
                pl.BlockSpec((1, 1, tl), lambda n, s: (n, 0, s)),   # targets tile
                pl.BlockSpec((C, 1), lambda n, s: (0, 0)),          # alpha (resident)
            ],
            out_specs=pl.BlockSpec((1, 1, 8, 128), lambda n, s: (n, s, 0, 0)),
        ),
        compiler_params=pltpu.CompilerParams(
            dimension_semantics=("parallel", "parallel"),
            vmem_limit_bytes=64 * 1024 * 1024,
        ),
    )(x, t, a)

    # Tree-reduce per-block partials in the wrapper (better numerics than a
    # single sequential scalar accumulator).
    total = jnp.sum(partials[:, :, 0, 0])
    if size_average:
        return total / jnp.float32(M)
    return total


def _reference_focal_loss(logits_nchw, target_nhw, gamma=2.0, alpha=None,
                          size_average=True):
    N, C, H, W = logits_nchw.shape
    x = jnp.transpose(logits_nchw, (0, 2, 3, 1)).reshape(-1, C).astype(jnp.float32)
    t = target_nhw.reshape(-1).astype(jnp.int32)
    logp = jax.nn.log_softmax(x, axis=1)
    logpt = jnp.take_along_axis(logp, t[:, None], axis=1)[:, 0]
    pt = jnp.exp(logpt)
    if alpha is not None:
        a = jnp.asarray(alpha, jnp.float32)
        if a.ndim == 0:
            a = jnp.array([float(a), 1.0 - float(a)], jnp.float32)
        logpt = logpt * a[t]
    loss = -((1.0 - pt) ** gamma) * logpt
    return loss.mean() if size_average else loss.sum()


if __name__ == "__main__":
    key = jax.random.PRNGKey(0)
    k1, k2 = jax.random.split(key)

    N, C, H, W = 2, 4, 16, 16
    logits = jax.random.normal(k1, (N, C, H, W), dtype=jnp.float32)
    target = jax.random.randint(k2, (N, H, W), 0, C, dtype=jnp.int32)

    gamma = 2.0
    alpha = [0.1, 0.2, 0.3, 0.4]   # deterministic per-class alpha (len == C)

    out = focal_loss(logits, target, gamma=gamma, alpha=alpha, size_average=True)
    out = jax.block_until_ready(out)

    ref = _reference_focal_loss(logits, target, gamma=gamma, alpha=alpha,
                                size_average=True)
    assert jnp.allclose(out, ref, rtol=1e-5, atol=1e-5), (out, ref)

    # Also exercise size_average=False and alpha=None paths.
    out2 = jax.block_until_ready(
        focal_loss(logits, target, gamma=gamma, alpha=None, size_average=False))
    ref2 = _reference_focal_loss(logits, target, gamma=gamma, alpha=None,
                                 size_average=False)
    assert jnp.allclose(out2, ref2, rtol=1e-5, atol=1e-5), (out2, ref2)

    print("KERNEL_OK")
</pallas_src>

<mosaic_0001>
module attributes {stable_mosaic.version = 11 : i64} {
  func.func @_focal_loss_kernel(%arg0: i32, %arg1: i32, %arg2: memref<1x4x256xf32, #tpu.memory_space<vmem>>, %arg3: memref<1x1x256xi32, #tpu.memory_space<vmem>>, %arg4: memref<4x1xf32, #tpu.memory_space<vmem>>, %arg5: memref<1x1x8x128xf32, #tpu.memory_space<vmem>>) attributes {dimension_semantics = [#tpu.dimension_semantics<parallel>, #tpu.dimension_semantics<parallel>], iteration_bounds = array<i64: 2, 1>, scalar_prefetch = 0 : i64, scratch_operands = 0 : i64, tpu.core_type = #tpu.core_type<tc>, window_params = [{transform_indices = @transform_0, window_bounds = array<i64: 1, 4, 256>}, {transform_indices = @transform_1, window_bounds = array<i64: 1, 1, 256>}, {pipeline_mode = #tpu.pipeline_mode<synchronous>, transform_indices = @transform_2, window_bounds = array<i64: 4, 1>}, {transform_indices = @transform_3, window_bounds = array<i64: 1, 1, 8, 128>}]} {
    %c0 = arith.constant 0 : index
    %c0_0 = arith.constant 0 : index
    %c0_1 = arith.constant 0 : index
    %0 = vector.load %arg2[%c0, %c0_0, %c0_1] : memref<1x4x256xf32, #tpu.memory_space<vmem>>, vector<1x4x256xf32>
    %1 = vector.shape_cast %0 : vector<1x4x256xf32> to vector<4x256xf32>
    %c0_2 = arith.constant 0 : index
    %c0_3 = arith.constant 0 : index
    %c0_4 = arith.constant 0 : index
    %2 = vector.load %arg3[%c0_2, %c0_3, %c0_4] : memref<1x1x256xi32, #tpu.memory_space<vmem>>, vector<1x1x256xi32>
    %3 = vector.shape_cast %2 : vector<1x1x256xi32> to vector<1x256xi32>
    %c0_5 = arith.constant 0 : index
    %c0_6 = arith.constant 0 : index
    %4 = vector.load %arg4[%c0_5, %c0_6] : memref<4x1xf32, #tpu.memory_space<vmem>>, vector<4x1xf32>
    %cst = arith.constant dense<0xFF800000> : vector<256xf32>
    %5 = vector.multi_reduction <maximumf>, %1, %cst [0] : vector<4x256xf32> to vector<256xf32>
    %6 = vector.shape_cast %5 : vector<256xf32> to vector<1x256xf32>
    %7 = vector.broadcast %6 : vector<1x256xf32> to vector<4x256xf32>
    %8 = arith.subf %1, %7 : vector<4x256xf32>
    %9 = math.exp %8 : vector<4x256xf32>
    %cst_7 = arith.constant dense<0.000000e+00> : vector<256xf32>
    %10 = vector.multi_reduction <add>, %9, %cst_7 [0] : vector<4x256xf32> to vector<256xf32>
    %11 = vector.shape_cast %10 : vector<256xf32> to vector<1x256xf32>
    %12 = math.log %11 : vector<1x256xf32>
    %13 = tpu.iota {dimensions = array<i32: 0>} : vector<4x256xi32>
    %14 = vector.broadcast %3 : vector<1x256xi32> to vector<4x256xi32>
    %15 = arith.cmpi eq, %13, %14 : vector<4x256xi32>
    %cst_8 = arith.constant 0.000000e+00 : f32
    %16 = vector.broadcast %cst_8 : f32 to vector<4x256xf32>
    %17 = arith.select %15, %8, %16 : vector<4x256xi1>, vector<4x256xf32>
    %cst_9 = arith.constant dense<0.000000e+00> : vector<256xf32>
    %18 = vector.multi_reduction <add>, %17, %cst_9 [0] : vector<4x256xf32> to vector<256xf32>
    %19 = vector.shape_cast %18 : vector<256xf32> to vector<1x256xf32>
    %cst_10 = arith.constant 0.000000e+00 : f32
    %20 = vector.shape_cast %4 : vector<4x1xf32> to vector<4x1xf32>
    %21 = vector.broadcast %20 : vector<4x1xf32> to vector<4x256xf32>
    %22 = vector.broadcast %cst_10 : f32 to vector<4x256xf32>
    %23 = arith.select %15, %21, %22 : vector<4x256xi1>, vector<4x256xf32>
    %cst_11 = arith.constant dense<0.000000e+00> : vector<256xf32>
    %24 = vector.multi_reduction <add>, %23, %cst_11 [0] : vector<4x256xf32> to vector<256xf32>
    %25 = vector.shape_cast %24 : vector<256xf32> to vector<1x256xf32>
    %26 = arith.subf %19, %12 : vector<1x256xf32>
    %27 = math.exp %26 : vector<1x256xf32>
    %cst_12 = arith.constant 1.000000e+00 : f32
    %28 = vector.broadcast %cst_12 : f32 to vector<1x256xf32>
    %29 = arith.subf %28, %27 : vector<1x256xf32>
    %cst_13 = arith.constant 0.000000e+00 : f32
    %30 = vector.broadcast %cst_13 : f32 to vector<1x256xf32>
    %31 = arith.maximumf %29, %30 : vector<1x256xf32>
    %32 = arith.mulf %31, %31 : vector<1x256xf32>
    %cst_14 = arith.constant 0.000000e+00 : f32
    %33 = vector.broadcast %cst_14 : f32 to vector<1x256xf32>
    %34 = arith.subf %33, %32 : vector<1x256xf32>
    %35 = arith.mulf %34, %26 : vector<1x256xf32>
    %36 = arith.mulf %35, %25 : vector<1x256xf32>
    %c256_i32 = arith.constant 256 : i32
    %37 = arith.muli %arg1, %c256_i32 : i32
    %38 = tpu.iota {dimensions = array<i32: 1>} : vector<1x256xi32>
    %39 = vector.broadcast %37 : i32 to vector<1x256xi32>
    %40 = arith.addi %39, %38 : vector<1x256xi32>
    %c256_i32_15 = arith.constant 256 : i32
    %41 = vector.broadcast %c256_i32_15 : i32 to vector<1x256xi32>
    %42 = arith.cmpi slt, %40, %41 : vector<1x256xi32>
    %cst_16 = arith.constant 0.000000e+00 : f32
    %43 = vector.broadcast %cst_16 : f32 to vector<1x256xf32>
    %44 = arith.select %42, %36, %43 : vector<1x256xi1>, vector<1x256xf32>
    %45 = vector.shape_cast %44 : vector<1x256xf32> to vector<1x1x256xf32>
    %cst_17 = arith.constant dense<0.000000e+00> : vector<1xf32>
    %46 = vector.multi_reduction <add>, %45, %cst_17 [1, 2] : vector<1x1x256xf32> to vector<1xf32>
    %47 = vector.shape_cast %46 : vector<1xf32> to vector<1x1x1xf32>
    %48 = vector.extract %47[0, 0, 0] : f32 from vector<1x1x1xf32>
    %cst_18 = arith.constant 0.000000e+00 : f32
    %49 = vector.broadcast %cst_18 : f32 to vector<1x1x8x128xf32>
    %50 = vector.broadcast %48 : f32 to vector<1x1x8x128xf32>
    %51 = arith.addf %49, %50 : vector<1x1x8x128xf32>
    %c0_19 = arith.constant 0 : index
    %c0_20 = arith.constant 0 : index
    %c0_21 = arith.constant 0 : index
    %c0_22 = arith.constant 0 : index
    %52 = vector.load %arg5[%c0_19, %c0_20, %c0_21, %c0_22] : memref<1x1x8x128xf32, #tpu.memory_space<vmem>>, vector<1x1x8x128xf32>
    tpu.vector_store %arg5[%c0_19, %c0_20, %c0_21, %c0_22], %51 {strides = array<i32>} : memref<1x1x8x128xf32, #tpu.memory_space<vmem>>, vector<1x1x8x128xf32>,
    return
  }
  func.func @transform_0(%arg0: i32, %arg1: i32) -> (i32, i32, i32) {
    %c0_i32 = arith.constant 0 : i32
    %c0_i32_0 = arith.constant 0 : i32
    return %arg0, %c0_i32, %arg1 : i32, i32, i32
  }
  func.func @transform_1(%arg0: i32, %arg1: i32) -> (i32, i32, i32) {
    %c0_i32 = arith.constant 0 : i32
    %c0_i32_0 = arith.constant 0 : i32
    return %arg0, %c0_i32, %arg1 : i32, i32, i32
  }
  func.func @transform_2(%arg0: i32, %arg1: i32) -> (i32, i32) {
    %c0_i32 = arith.constant 0 : i32
    %c0_i32_0 = arith.constant 0 : i32
    %c0_i32_1 = arith.constant 0 : i32
    return %c0_i32, %c0_i32_0 : i32, i32
  }
  func.func @transform_3(%arg0: i32, %arg1: i32) -> (i32, i32, i32, i32) {
    %c0_i32 = arith.constant 0 : i32
    %c0_i32_0 = arith.constant 0 : i32
    %c0_i32_1 = arith.constant 0 : i32
    return %arg0, %arg1, %c0_i32, %c0_i32_0 : i32, i32, i32, i32
  }
}

</mosaic_0001>

<llo_original>
// kernel: tpu_custom_call.1
$region0: #{tpu_custom_call.1}
  #allocation0 [shape = 'u32[]', space=smem, size = 0x4, offset = 0x4, fixed_abs, tag = 'smem constant byte address 0x4 - core index']
  #allocation1 [shape = 'u32[144,128]{1,0:T(1,128)}', space=vmem, size = 0x12000, scoped, tag = 'internal scratch']
  %s0 = inlined_call_operand.hbm [shape: f32[2,4,256], index: 0, kind: input, shape index: {}]
  %s1 = inlined_call_operand.hbm [shape: s32[2,1,256], index: 1, kind: input, shape index: {}]
  %s2 = inlined_call_operand.hbm [shape: f32[4,1], index: 2, kind: input, shape index: {}]
  %s3 = inlined_call_operand.hbm [shape: f32[2,1,8,128], index: 3, kind: output, shape index: {}]
  %s4 = sld [smem:[#allocation0]]
  $region57: #{tpu_custom_call.1} parent=0
    _
  %s6 = ssub.s32 1, %s4
  %s7 = scalar_select 0, %s6, %s4
  $region1: #{tpu_custom_call.1} parent=0
    #allocation2 [shape = 'u8[8192]{0}', space=vmem, size = 0x2000, scoped, tag = 'input window, operand 0']
    #allocation3 [shape = 's32[2]{0}', space=sflag, size = 0x8, scoped, tag = 'scoped memory for tpu_custom_call.1']
    #allocation4 [shape = 's32[2]{0}', space=sflag, size = 0x8, scoped, tag = 'scoped memory for tpu_custom_call.1']
    #allocation5 [shape = 'u8[2048]{0}', space=vmem, size = 0x800, scoped, tag = 'input window, operand 1']
    #allocation6 [shape = 's32[2]{0}', space=sflag, size = 0x8, scoped, tag = 'scoped memory for tpu_custom_call.1']
    #allocation7 [shape = 'u8[2048]{0}', space=vmem, size = 0x800, scoped, tag = 'input window, operand 2, single buffered']
    #allocation8 [shape = 'u8[8192]{0}', space=vmem, size = 0x2000, scoped, tag = 'output window, operand 0']
    %8 = vsyncpa [#allocation3], 0
    %s9 = scalar_lea.sflag [#allocation3], 1
    %10 = vsyncpa %s9, 0
    %11 = vsyncpa [#allocation6], 0
    %s12 = scalar_lea.sflag [#allocation6], 1
    %13 = vsyncpa %s12, 0
    %14 = vsyncpa [#allocation4], 0
    %s15 = scalar_lea.sflag [#allocation4], 1
    %16 = vsyncpa %s15, 0
    loop: start=0, step=1, limit=4
    $region2: #{tpu_custom_call.1} parent=1 // loop_pre_header
      _
    $region3: #{tpu_custom_call.1} parent=1 // loop_header
      %s18 = sphi 0, %s22
      %p19 = scmp.ge.s32.totalorder %s18, 4
      %s25 = sphi 0, %s37
      %s26 = sphi 0, %s33
      %s27 = sphi 0, %s25
      %s28 = sphi 0, %s26
      %s29 = sphi 0, %s27
      %s30 = sphi 0, %s28
      %s42 = sphi 0, %s44
      %s45 = sphi 0, %s42
      %s46 = sphi 0, %s45
      %s62 = sphi 0, %s46
      %s70 = sphi 0, %s72
      %s73 = sphi 0, %s70
      %s74 = sphi 0, %s73
      %s90 = sphi 0, %s74
      %s94 = sphi 0, %s94
      %s96 = sphi 0, %s94
      %s97 = sphi 0, %s96
      %s111 = sphi 0, %s97
      %s119 = sphi 0, %s121
      %s122 = sphi 0, %s119
      %s123 = sphi 0, %s122
      %s139 = sphi 0, %s123
    $region4: #{tpu_custom_call.1} parent=1 // loop_header_branch
      %21 = sbr.rel (%p19) target = $region8
    $region5: #{tpu_custom_call.1} parent=1 // loop_body
      %s23 = ssub.s32 %s18, 1
      %s24 = ssub.s32 %s18, 2
      %s31 = sadd.s32 1, %s26
      %p32 = scmp.ge.s32.totalorder %s31, 1
      %s33 = scalar_select %p32, 0, %s31
      %s34 = sadd.s32 1, %s25
      %s35 = scalar_select %p32, %s34, %s25
      %p36 = scmp.ge.s32.totalorder %s35, 2
      %s37 = scalar_select %p36, 0, %s35
      %s38 = ssub.s32 %s25, %s37
      %s39 = ssub.s32 %s26, %s33
      %s40 = sor.u32 %s38, %s39
      %p41 = scmp.eq.s32.totalorder %s40, 0
      %s43 = sadd.s32 %s42, 1
      %s44 = scalar_select %p41, %s42, %s43
      %p47 = pneg %p41
      %p48 = scmp.eq.s32.totalorder %s18, 1
      %p49 = por %p47, %p48
      %p50 = scmp.ne.s32.totalorder %s42, %s45
      %p51 = scmp.eq.s32.totalorder %s18, 0
      %p52 = por %p50, %p51
      %p53 = scmp.ne.s32.totalorder %s42, %s45
      %p54 = scmp.eq.s32.totalorder %s23, 1
      %p55 = por %p53, %p54
      %p56 = scmp.ne.s32.totalorder %s45, %s46
      %p57 = scmp.eq.s32.totalorder %s23, 0
      %p58 = por %p56, %p57
      %p59 = scmp.ne.s32.totalorder %s45, %s46
      %p60 = scmp.eq.s32.totalorder %s24, 1
      %p61 = por %p59, %p60
      %p63 = scmp.ne.s32.totalorder %s46, %s62
      %p64 = scmp.eq.s32.totalorder %s24, 0
      %p65 = por %p63, %p64
      %s66 = ssub.s32 %s25, %s37
      %s67 = ssub.s32 %s26, %s33
      %s68 = sor.u32 %s66, %s67
      %p69 = scmp.eq.s32.totalorder %s68, 0
      %s71 = sadd.s32 %s70, 1
      %s72 = scalar_select %p69, %s70, %s71
      %p75 = pneg %p69
      %p76 = scmp.eq.s32.totalorder %s18, 1
      %p77 = por %p75, %p76
      %p78 = scmp.ne.s32.totalorder %s70, %s73
      %p79 = scmp.eq.s32.totalorder %s18, 0
      %p80 = por %p78, %p79
      %p81 = scmp.ne.s32.totalorder %s70, %s73
      %p82 = scmp.eq.s32.totalorder %s23, 1
      %p83 = por %p81, %p82
      %p84 = scmp.ne.s32.totalorder %s73, %s74
      %p85 = scmp.eq.s32.totalorder %s23, 0
      %p86 = por %p84, %p85
      %p87 = scmp.ne.s32.totalorder %s73, %s74
      %p88 = scmp.eq.s32.totalorder %s24, 1
      %p89 = por %p87, %p88
      %p91 = scmp.ne.s32.totalorder %s74, %s90
      %p92 = scmp.eq.s32.totalorder %s24, 0
      %p93 = por %p91, %p92
      %s95 = sadd.s32 %s94, 1
      %p98 = scmp.eq.s32.totalorder %s18, 1
      %p99 = scmp.ne.s32.totalorder %s94, %s96
      %p100 = scmp.eq.s32.totalorder %s18, 0
      %p101 = por %p99, %p100
      %p102 = scmp.ne.s32.totalorder %s94, %s96
      %p103 = scmp.eq.s32.totalorder %s23, 1
      %p104 = por %p102, %p103
      %p105 = scmp.ne.s32.totalorder %s96, %s97
      %p106 = scmp.eq.s32.totalorder %s23, 0
      %p107 = por %p105, %p106
      %p108 = scmp.ne.s32.totalorder %s96, %s97
      %p109 = scmp.eq.s32.totalorder %s24, 1
      %p110 = por %p108, %p109
      %p112 = scmp.ne.s32.totalorder %s97, %s111
      %p113 = scmp.eq.s32.totalorder %s24, 0
      %p114 = por %p112, %p113
      %s115 = ssub.s32 %s25, %s37
      %s116 = ssub.s32 %s26, %s33
      %s117 = sor.u32 %s115, %s116
      %p118 = scmp.eq.s32.totalorder %s117, 0
      %s120 = sadd.s32 %s119, 1
      %s121 = scalar_select %p118, %s119, %s120
      %p124 = pneg %p118
      %p125 = scmp.eq.s32.totalorder %s18, 1
      %p126 = por %p124, %p125
      %p127 = scmp.ne.s32.totalorder %s119, %s122
      %p128 = scmp.eq.s32.totalorder %s18, 0
      %p129 = por %p127, %p128
      %p130 = scmp.ne.s32.totalorder %s119, %s122
      %p131 = scmp.eq.s32.totalorder %s23, 1
      %p132 = por %p130, %p131
      %p133 = scmp.ne.s32.totalorder %s122, %s123
      %p134 = scmp.eq.s32.totalorder %s23, 0
      %p135 = por %p133, %p134
      %p136 = scmp.ne.s32.totalorder %s122, %s123
      %p137 = scmp.eq.s32.totalorder %s24, 1
      %p138 = por %p136, %p137
      %p140 = scmp.ne.s32.totalorder %s123, %s139
      %p141 = scmp.eq.s32.totalorder %s24, 0
      %p142 = por %p140, %p141
      %p143 = scmp.le.s32.totalorder 1, %s18
      %p144 = scmp.lt.s32.totalorder %s18, 3
      %p145 = pnand %p143, %p144
      %p146 = pneg %p145
      // Predicated region
      $region9: #{tpu_custom_call.1} parent=5 // pred_check
        _
      $region10: #{tpu_custom_call.1} parent=5 // pred_check_branch
        %148 = sbr.rel (%p145) target = $region12
      $region11: #{tpu_custom_call.1} parent=5 // pred_region
        %s149 = ssub.s32 %s18, 1
        // Predicated region
        $region13: #{tpu_custom_call.1} parent=11 // pred_check
          %p150 = pneg %p107
        $region14: #{tpu_custom_call.1} parent=11 // pred_check_branch
          %152 = sbr.rel (%p150) target = $region16
        $region15: #{tpu_custom_call.1} parent=11 // pred_region
          %s154 = ssub.s32 64, 64
          %155 = vsyncadd [#allocation6], %s154
          %s157 = sshll.u32 [#allocation7], 4
          %s158 = int_to_ptr.vmem [resolvable:$true] %s157
          %160 = dma.hbm_to_vmem [thread:$0]  %s2, 64, %s158, [#allocation6]
        $region16: #{tpu_custom_call.1} parent=11 // pred_fallthru
          _
      $region12: #{tpu_custom_call.1} parent=5 // pred_fallthru
        _
      %p161 = scmp.lt.s32.totalorder %s18, 2
      // Predicated region
      $region17: #{tpu_custom_call.1} parent=5 // pred_check
        %p162 = pneg %p161
      $region18: #{tpu_custom_call.1} parent=5 // pred_check_branch
        %164 = sbr.rel (%p162) target = $region20
      $region19: #{tpu_custom_call.1} parent=5 // pred_region
        // Predicated region
        $region21: #{tpu_custom_call.1} parent=19 // pred_check
          %p165 = pneg %p52
        $region22: #{tpu_custom_call.1} parent=19 // pred_check_branch
          %167 = sbr.rel (%p165) target = $region24
        $region23: #{tpu_custom_call.1} parent=19 // pred_region
          %s168 = sand.u32 %s42, 1
          %s169 = scalar_lea.sflag [#allocation3], %s168
          %s170 = sand.u32 %s42, 1
          %s171 = smul.addr %s170, 8
          %s172 = scalar_lea.vmem [#allocation2], %s171
          %s173 = smul.u32 2, %s26
          %s175 = ssub.s32 128, 128
          %176 = vsyncadd %s169, %s175
          %s177 = smul.addr %s25, 2
          %s178 = sadd.s32 %s173, %s177
          %s179 = smul.addr %s178, 64
          %s180 = scalar_lea.hbm %s0, %s179
          %s182 = sshll.u32 %s172, 4
          %s183 = int_to_ptr.vmem [resolvable:$true] %s182
          %185 = dma.hbm_to_vmem [thread:$0]  %s180, 128, %s183, %s169
        $region24: #{tpu_custom_call.1} parent=19 // pred_fallthru
          _
        // Predicated region
        $region25: #{tpu_custom_call.1} parent=19 // pred_check
          %p186 = pneg %p80
        $region26: #{tpu_custom_call.1} parent=19 // pred_check_branch
          %188 = sbr.rel (%p186) target = $region28
        $region27: #{tpu_custom_call.1} parent=19 // pred_region
          %s189 = sand.u32 %s18, 1
          %s190 = scalar_lea.sflag [#allocation6], %s189
          %s191 = sand.u32 %s70, 1
          %s192 = smul.addr %s191, 2
          %s193 = scalar_lea.vmem [#allocation5], %s192
          %s194 = smul.u32 2, %s26
          %s196 = ssub.s32 32, 32
          %197 = vsyncadd %s190, %s196
          %s198 = smul.addr %s25, 2
          %s199 = sadd.s32 %s194, %s198
          %s200 = smul.addr %s199, 16
          %s201 = scalar_lea.hbm %s1, %s200
          %s203 = sshll.u32 %s193, 4
          %s204 = int_to_ptr.vmem [resolvable:$true] %s203
          %206 = dma.hbm_to_vmem [thread:$0]  %s201, 32, %s204, %s190
        $region28: #{tpu_custom_call.1} parent=19 // pred_fallthru
          _
      $region20: #{tpu_custom_call.1} parent=5 // pred_fallthru
        _
      %p207 = scmp.le.s32.totalorder 1, %s18
      %p208 = scmp.lt.s32.totalorder %s18, 3
      %p209 = pnand %p207, %p208
      %p210 = pneg %p209
      // Predicated region
      $region29: #{tpu_custom_call.1} parent=5 // pred_check
        _
      $region30: #{tpu_custom_call.1} parent=5 // pred_check_branch
        %212 = sbr.rel (%p209) target = $region32
      $region31: #{tpu_custom_call.1} parent=5 // pred_region
        %s213 = ssub.s32 %s18, 1
        %s214 = sand.u32 %s45, 1
        %s215 = scalar_lea.sflag [#allocation3], %s214
        %s216 = sand.u32 %s45, 1
        %s217 = smul.addr %s216, 8
        %s218 = scalar_lea.vmem [#allocation2], %s217
        // Predicated region
        $region33: #{tpu_custom_call.1} parent=31 // pred_check
          %p219 = pneg %p58
        $region34: #{tpu_custom_call.1} parent=31 // pred_check_branch
          %221 = sbr.rel (%p219) target = $region36
        $region35: #{tpu_custom_call.1} parent=31 // pred_region
          %222 = dma.done %s215, 128
        $region36: #{tpu_custom_call.1} parent=31 // pred_fallthru
          _
        %s223 = sand.u32 %s23, 1
        %s224 = scalar_lea.sflag [#allocation6], %s223
        %s225 = sand.u32 %s73, 1
        %s226 = smul.addr %s225, 2
        %s227 = scalar_lea.vmem [#allocation5], %s226
        // Predicated region
        $region37: #{tpu_custom_call.1} parent=31 // pred_check
          %p228 = pneg %p86
        $region38: #{tpu_custom_call.1} parent=31 // pred_check_branch
          %230 = sbr.rel (%p228) target = $region40
        $region39: #{tpu_custom_call.1} parent=31 // pred_region
          %231 = dma.done %s224, 32
        $region40: #{tpu_custom_call.1} parent=31 // pred_fallthru
          _
        // Predicated region
        $region41: #{tpu_custom_call.1} parent=31 // pred_check
          %p232 = pneg %p107
        $region42: #{tpu_custom_call.1} parent=31 // pred_check_branch
          %234 = sbr.rel (%p232) target = $region44
        $region43: #{tpu_custom_call.1} parent=31 // pred_region
          %235 = dma.done [#allocation6], 64
        $region44: #{tpu_custom_call.1} parent=31 // pred_fallthru
          _
        %s236 = sand.u32 %s45, 1
        %s237 = scalar_lea.sflag [#allocation3], %s236
        %s238 = sand.u32 %s45, 1
        %s239 = smul.addr %s238, 8
        %s240 = scalar_lea.vmem [#allocation2], %s239
        %p241 = pneg %p58
        %p242 = pneg %p55
        %s243 = sand.u32 %s23, 1
        %s244 = scalar_lea.sflag [#allocation6], %s243
        %s245 = sand.u32 %s73, 1
        %s246 = smul.addr %s245, 2
        %s247 = scalar_lea.vmem [#allocation5], %s246
        %p248 = pneg %p86
        %p249 = pneg %p83
        %p250 = pneg %p107
        %p251 = pneg %p104
        %p252 = pneg %p135
        %p253 = pneg %p132
        %s254 = sand.u32 %s122, 1
        %s255 = scalar_lea.sflag [#allocation4], %s254
        %s256 = sand.u32 %s122, 1
        %s257 = smul.addr %s256, 8
        %s258 = scalar_lea.vmem [#allocation8], %s257
        %s259 = smul.u32 2, %s28
        %s260 = smul.u32 2, %s28
        %v261 = vld [vmem:[%s218] sm:$0xff]
        %v262 = vld [vmem:[%s227] sm:$0x3]
        %v263 = vld [vmem:[#allocation7] sm:$0xf]
        %v265 = vcombine.high %v261, %v261
        %vm267 = vcmask 1043456
        %v268 = vsel %vm267, %v261, -inf
        %v269 = vrot.slane %v268, 4
        %v270 = vmax.f32 %v268, %v269
        %v271 = vrot.slane %v270, 2
        %v272 = vmax.f32 %v270, %v271
        %v273 = vrot.slane %v272, 1
        %v274 = vmax.f32 %v272, %v273
        %v275 = vsel %vm267, %v265, -inf
        %v276 = vrot.slane %v275, 4
        %v277 = vmax.f32 %v275, %v276
        %v278 = vrot.slane %v277, 2
        %v279 = vmax.f32 %v277, %v278
        %v280 = vrot.slane %v279, 1
        %v281 = vmax.f32 %v279, %v280
        %v284 = vcombine.low %v274, %v281
        %v286 = vsub.f32 %v261, %v284
        %v287 = vmul.f32 %v286, 1.442695
        %v288 = vpow.pop %v287
        %v290 = vcombine.high %v288, %v288
        %v292 = vsel %vm267, %v288, 0.0
        %v293 = vrot.slane %v292, 4
        %v294 = vadd.f32 %v292, %v293
        %v295 = vrot.slane %v294, 2
        %v296 = vadd.f32 %v294, %v295
        %v297 = vrot.slane %v296, 1
        %v298 = vadd.f32 %v296, %v297
        %v299 = vsel %vm267, %v290, 0.0
        %v300 = vrot.slane %v299, 4
        %v301 = vadd.f32 %v299, %v300
        %v302 = vrot.slane %v301, 2
        %v303 = vadd.f32 %v301, %v302
        %v304 = vrot.slane %v303, 1
        %v305 = vadd.f32 %v303, %v304
        %v306 = vlog2.pop %v298
        %v307 = vmul.f32 %v306, 0.6931472
        %v308 = vlog2.pop %v305
        %v309 = vmul.f32 %v308, 0.6931472
        %v310 = vlaneseq
        %v311 = vshrl.u32 %v310, 7
        %v312 = vlaneseq
        %v313 = vshrl.u32 %v312, 7
        %v314 = vsub.s32 0, %v313
        %v315 = vrot.slane %v262, %v314
        %v316 = vlaneseq
        %v317 = vshrl.u32 %v316, 7
        %v318 = vsub.s32 1, %v317
        %v319 = vrot.slane %v262, %v318
        %vm320 = vcmp.eq.s32.totalorder %v311, %v315
        %vm321 = vcmp.eq.s32.totalorder %v311, %v319
        %v323 = vcombine.high %v286, %v286
        %v325 = vsel %vm320, %v286, 0.0
        %v326 = vsel %vm321, %v323, 0.0
        %v327 = vsel %vm267, %v325, 0.0
        %v328 = vrot.slane %v327, 4
        %v329 = vadd.f32 %v327, %v328
        %v330 = vrot.slane %v329, 2
        %v331 = vadd.f32 %v329, %v330
        %v332 = vrot.slane %v331, 1
        %v333 = vadd.f32 %v331, %v332
        %v334 = vsel %vm267, %v326, 0.0
        %v335 = vrot.slane %v334, 4
        %v336 = vadd.f32 %v334, %v335
        %v337 = vrot.slane %v336, 2
        %v338 = vadd.f32 %v336, %v337
        %v339 = vrot.slane %v338, 1
        %v340 = vadd.f32 %v338, %v339
        %342 = vset.pattern.permute.xlu0 0
        %343 = vperm.xlu0 %342, %v263
        %v344 = vpop.permute.xlu0 %343
        %v346 = vsel %vm320, %v344, 0.0
        %v347 = vsel %vm321, %v344, 0.0
        %v348 = vsel %vm267, %v346, 0.0
        %v349 = vrot.slane %v348, 4
        %v350 = vadd.f32 %v348, %v349
        %v351 = vrot.slane %v350, 2
        %v352 = vadd.f32 %v350, %v351
        %v353 = vrot.slane %v352, 1
        %v354 = vadd.f32 %v352, %v353
        %v355 = vsel %vm267, %v347, 0.0
        %v356 = vrot.slane %v355, 4
        %v357 = vadd.f32 %v355, %v356
        %v358 = vrot.slane %v357, 2
        %v359 = vadd.f32 %v357, %v358
        %v360 = vrot.slane %v359, 1
        %v361 = vadd.f32 %v359, %v360
        %v362 = vsub.f32 %v333, %v307
        %v363 = vsub.f32 %v340, %v309
        %v364 = vmul.f32 %v362, 1.442695
        %v365 = vpow.pop %v364
        %v366 = vmul.f32 %v363, 1.442695
        %v367 = vpow.pop %v366
        %v368 = vsub.f32 1.0, %v365
        %v369 = vsub.f32 1.0, %v367
        %v370 = vmax.f32 %v368, 0.0
        %v371 = vmax.f32 %v369, 0.0
        %v372 = vmul.f32 %v370, %v370
        %v373 = vmul.f32 %v371, %v371
        %v374 = vsub.f32 0.0, %v372
        %v375 = vsub.f32 0.0, %v373
        %v376 = vmul.f32 %v374, %v362
        %v377 = vmul.f32 %v375, %v363
        %v378 = vmul.f32 %v376, %v354
        %v379 = vmul.f32 %v377, %v361
        %s380 = smul.u32 %s28, 256
        %v381 = vlaneseq
        %v382 = vand.u32 %v381, 127
        %v383 = vadd.s32 %v382, 128
        %v384 = vstv %s380
        %v385 = vadd.s32 %v384, %v382
        %v386 = vadd.s32 %v384, %v383
        %vm387 = vcmp.lt.s32.totalorder %v385, 256
        %vm388 = vcmp.lt.s32.totalorder %v386, 256
        %v389 = vsel %vm387, %v378, 0.0
        %v390 = vsel %vm388, %v379, 0.0
        %vm391 = vcmask 1040384
        %v392 = vsel %vm391, %v389, 0.0
        %v393 = vsel %vm391, %v390, 0.0
        %v394 = vadd.f32 %v392, %v393
        %395 = vadd.xlane.f32.xlu0 %v394
        %v396 = vpop.xlane.xlu0 %395
        %v397 = vrot.slane %v396, 4
        %v398 = vadd.f32 %v396, %v397
        %v399 = vrot.slane %v398, 2
        %v400 = vadd.f32 %v398, %v399
        %v401 = vrot.slane %v400, 1
        %v402 = vadd.f32 %v400, %v401
        %s403 = vtos %v402
        %v404 = vstv %s403
        %v405 = vadd.f32 %v404, 0.0
        %406 = vst [vmem:[%s258] sm:$0xff] %v405
        %s407 = sand.u32 %s122, 1
        %s408 = scalar_lea.sflag [#allocation4], %s407
        %s409 = sand.u32 %s122, 1
        %s410 = smul.addr %s409, 8
        %s411 = scalar_lea.vmem [#allocation8], %s410
        // Predicated region
        $region45: #{tpu_custom_call.1} parent=31 // pred_check
          %p412 = pneg %p132
        $region46: #{tpu_custom_call.1} parent=31 // pred_check_branch
          %414 = sbr.rel (%p412) target = $region48
        $region47: #{tpu_custom_call.1} parent=31 // pred_region
          %s416 = ssub.s32 128, 128
          %417 = vsyncadd %s408, %s416
          %s418 = sadd.s32 %s28, %s27
          %s419 = smul.addr %s418, 128
          %s420 = scalar_lea.hbm %s3, %s419
          %s422 = sshll.u32 %s411, 4
          %s423 = int_to_ptr.vmem [resolvable:$true] %s422
          %425 = dma.vmem_to_hbm [thread:$0]  %s423, 128, %s420, %s408
        $region48: #{tpu_custom_call.1} parent=31 // pred_fallthru
          _
      $region32: #{tpu_custom_call.1} parent=5 // pred_fallthru
        _
      %p426 = scmp.le.s32.totalorder 2, %s18
      // Predicated region
      $region49: #{tpu_custom_call.1} parent=5 // pred_check
        %p427 = pneg %p426
      $region50: #{tpu_custom_call.1} parent=5 // pred_check_branch
        %429 = sbr.rel (%p427) target = $region52
      $region51: #{tpu_custom_call.1} parent=5 // pred_region
        %s430 = ssub.s32 %s18, 2
        // Predicated region
        $region53: #{tpu_custom_call.1} parent=51 // pred_check
          %p431 = pneg %p138
        $region54: #{tpu_custom_call.1} parent=51 // pred_check_branch
          %433 = sbr.rel (%p431) target = $region56
        $region55: #{tpu_custom_call.1} parent=51 // pred_region
          %s434 = sand.u32 %s123, 1
          %s435 = scalar_lea.sflag [#allocation4], %s434
          %s436 = sand.u32 %s123, 1
          %s437 = smul.addr %s436, 8
          %s438 = scalar_lea.vmem [#allocation8], %s437
          %439 = dma.done %s435, 128
        $region56: #{tpu_custom_call.1} parent=51 // pred_fallthru
          _
      $region52: #{tpu_custom_call.1} parent=5 // pred_fallthru
        _
    $region6: #{tpu_custom_call.1} parent=1 // loop_footer
      %s22 = sadd.s32 1, %s18
    $region7: #{tpu_custom_call.1} parent=1 // loop_footer_branch
      %17 = sbr.rel target = $region3
    $region8: #{tpu_custom_call.1} parent=1 // loop_exit
      _
    %440 = vsyncpa [#allocation3], 1
    %s441 = scalar_lea.sflag [#allocation3], 1
    %442 = vsyncpa %s441, 1
    %443 = vsyncpa [#allocation6], 1
    %s444 = scalar_lea.sflag [#allocation6], 1
    %445 = vsyncpa %s444, 1
    %446 = vsyncpa [#allocation4], 1
    %s447 = scalar_lea.sflag [#allocation4], 1
    %448 = vsyncpa %s447, 1

</llo_original>
